<compile_context>
chip_gen: v7x
topology: tpu7x:2x2x1
jax: 0.10.0
libtpu: 0.0.40
codegen_flags: <defaults>
</compile_context>

<pallas_src>
import functools

import numpy as np
import jax
import jax.numpy as jnp
from jax.experimental import pallas as pl
from jax.experimental.pallas import tpu as pltpu


def _round_up(x, m):
    return (x + m - 1) // m * m


def _grb_kernel(x_ref, win_ref, bin_ref, wfg_ref, bfg_ref,
                wskip_ref, bskip_ref, wout_ref, bout_ref,
                out_ref, skip_ref, res_ref,
                *, tT, R, K, D, PAD, PAD_AL):
    """One grid step = (batch element n, time tile t).  Time is on lanes.

    x_ref    : (1, C_in, tT)        input tile (native layout, any float dtype)
    win_ref  : (R, C_in)      bf16  conv_in weight (1x1 conv == matmul)
    wfg_ref  : (K, 2R, R)     bf16  per-tap fused [filter; gate] weights
    wskip_ref: (S, R)         bf16  conv_skip weight
    wout_ref : (C_in, R)      bf16  conv_out weight
    b*_ref   : (*, 1)         f32   per-channel biases (broadcast over lanes)
    out_ref  : (1, C_in, tT)        final `out`  tile (out + x residual)
    skip_ref : (1, S, tT)           final `skip` tile
    res_ref  : (R, PAD_AL+tT) bf16  persistent scratch: [halo | current tile]
    """
    t = pl.program_id(1)
    base = PAD_AL - PAD

    if PAD > 0:
        # Carried causal halo: columns [base, PAD_AL) must hold the residual of
        # the PAD time steps preceding this tile.  For the first tile of each
        # batch element that is zeros (causal left-padding); otherwise it is the
        # tail of the previous tile's residual, still sitting in the scratch.
        @pl.when(t == 0)
        def _zero_halo():
            res_ref[:, base:PAD_AL] = jnp.zeros((R, PAD), res_ref.dtype)

        @pl.when(t > 0)
        def _carry_halo():
            tail = res_ref[:, PAD_AL + tT - PAD:PAD_AL + tT]
            res_ref[:, base:PAD_AL] = tail

    x_f32 = x_ref[0].astype(jnp.float32)                          # (C_in, tT)
    x_bf = x_f32.astype(jnp.bfloat16)

    # conv_in (1x1): residual of the current tile, stored lane-aligned at
    # offset PAD_AL (multiple of 128).
    res_cur = jnp.dot(win_ref[...], x_bf,
                      preferred_element_type=jnp.float32) + bin_ref[...]
    res_ref[:, PAD_AL:PAD_AL + tT] = res_cur.astype(res_ref.dtype)

    # Causal dilated conv, filter & gate fused per tap.  K accumulating MXU
    # dots (no lane-concat of non-128-multiple R chunks); f32 accumulation.
    fg = jnp.dot(wfg_ref[0], res_ref[:, base:base + tT],
                 preferred_element_type=jnp.float32)              # (2R, tT)
    for j in range(1, K):
        fg = fg + jnp.dot(wfg_ref[j],
                          res_ref[:, base + j * D:base + j * D + tT],
                          preferred_element_type=jnp.float32)
    fg = fg + bfg_ref[...]

    filt = jnp.tanh(fg[:R, :])
    gate = 0.5 * (jnp.tanh(0.5 * fg[R:, :]) + 1.0)   # sigmoid via one EUP tanh
    gated = (filt * gate).astype(jnp.bfloat16)                    # (R, tT)

    # conv_skip / conv_out straight into final-layout, lane-dense outputs.
    skip_ref[0] = (jnp.dot(wskip_ref[...], gated,
                           preferred_element_type=jnp.float32)
                   + bskip_ref[...]).astype(skip_ref.dtype)
    out_ref[0] = (jnp.dot(wout_ref[...], gated,
                          preferred_element_type=jnp.float32)
                  + bout_ref[...] + x_f32).astype(out_ref.dtype)


def gated_residual_block(x_ncw, w_in, b_in, w_f, b_f, w_g, b_g,
                         w_skip, b_skip, w_out, b_out, *,
                         dilation, t_tile=None, out_dtype=jnp.bfloat16):
    """Pallas implementation of GatedResidualBlock.forward.

    x_ncw  : (N, C_in, T)          -- native PyTorch Conv1d layout (no transposes)
    w_in   : (R, C_in, 1), b_in (R,)
    w_f    : (R, R, K),    b_f  (R,)
    w_g    : (R, R, K),    b_g  (R,)
    w_skip : (S, R, 1),    b_skip (S,)
    w_out  : (C_in, R, 1), b_out (C_in,)
    returns (out (N, C_in, T), skip (N, S, T)) in `out_dtype` (default bf16).
    """
    N, C_in, T = x_ncw.shape
    R = w_in.shape[0]
    S = w_skip.shape[0]
    K = w_f.shape[2]
    D = int(dilation)
    PAD = (K - 1) * D
    PAD_AL = _round_up(PAD, 128) if PAD > 0 else 0   # lane-aligned halo region

    # ---- time tiling: time is the lane axis, tiles are multiples of 128 -----
    if t_tile is None:
        t_tile = 8192 if max(C_in, R, S) <= 128 else 2048
    if T < 128:
        tT = T                                   # block == full dim (allowed)
    else:
        tT = max(128, min(_round_up(t_tile, 128), (T // 128) * 128))
    nT = -(-T // tT)                             # partial last block is fine

    # ---- weights / biases: tiny tensors, reshape & cast once ----------------
    win = w_in[:, :, 0].astype(jnp.bfloat16)                       # (R, C_in)
    wfg = jnp.transpose(jnp.concatenate([w_f, w_g], axis=0),
                        (2, 0, 1)).astype(jnp.bfloat16)            # (K, 2R, R)
    wskip = w_skip[:, :, 0].astype(jnp.bfloat16)                   # (S, R)
    wout = w_out[:, :, 0].astype(jnp.bfloat16)                     # (C_in, R)
    bin2 = b_in.reshape(R, 1).astype(jnp.float32)
    bfg2 = jnp.concatenate([b_f, b_g]).reshape(2 * R, 1).astype(jnp.float32)
    bskip2 = b_skip.reshape(S, 1).astype(jnp.float32)
    bout2 = b_out.reshape(C_in, 1).astype(jnp.float32)

    kernel = functools.partial(_grb_kernel, tT=tT, R=R, K=K, D=D,
                               PAD=PAD, PAD_AL=PAD_AL)

    # ---- VMEM budget (double-buffered activations + persistent scratch) -----
    xb = x_ncw.dtype.itemsize
    ob = np.dtype(out_dtype).itemsize
    vmem_est = (2 * C_in * tT * xb                 # x
                + 2 * (C_in + S) * tT * ob         # out + skip
                + R * (PAD_AL + tT) * 2            # bf16 residual scratch
                + 2 * 2 * (K * 2 * R * R + (C_in + S + C_in) * R)
                + (1 << 20))
    vmem_limit = int(min(48 * 2 ** 20, max(16 * 2 ** 20, 2 * vmem_est)))

    cost = pl.CostEstimate(
        flops=2 * N * T * (C_in * R + K * R * 2 * R + R * (S + C_in)),
        transcendentals=2 * N * T * R,
        bytes_accessed=N * T * (C_in * xb + (C_in + S) * ob))

    out, skip = pl.pallas_call(
        kernel,
        out_shape=(jax.ShapeDtypeStruct((N, C_in, T), out_dtype),
                   jax.ShapeDtypeStruct((N, S, T), out_dtype)),
        grid=(N, nT),
        in_specs=[
            pl.BlockSpec((1, C_in, tT), lambda n, t: (n, 0, t)),     # x
            pl.BlockSpec((R, C_in), lambda n, t: (0, 0)),            # w_in
            pl.BlockSpec((R, 1), lambda n, t: (0, 0)),               # b_in
            pl.BlockSpec((K, 2 * R, R), lambda n, t: (0, 0, 0)),     # w_fg
            pl.BlockSpec((2 * R, 1), lambda n, t: (0, 0)),           # b_fg
            pl.BlockSpec((S, R), lambda n, t: (0, 0)),               # w_skip
            pl.BlockSpec((S, 1), lambda n, t: (0, 0)),               # b_skip
            pl.BlockSpec((C_in, R), lambda n, t: (0, 0)),            # w_out
            pl.BlockSpec((C_in, 1), lambda n, t: (0, 0)),            # b_out
        ],
        out_specs=(pl.BlockSpec((1, C_in, tT), lambda n, t: (n, 0, t)),
                   pl.BlockSpec((1, S, tT), lambda n, t: (n, 0, t))),
        scratch_shapes=[pltpu.VMEM((R, PAD_AL + tT), jnp.bfloat16)],
        compiler_params=pltpu.CompilerParams(
            dimension_semantics=("parallel", "arbitrary"),
            vmem_limit_bytes=vmem_limit),
        cost_estimate=cost,
    )(x_ncw, win, bin2, wfg, bfg2, wskip, bskip2, wout, bout2)
    return out, skip


def _reference(x_ncw, w_in, b_in, w_f, b_f, w_g, b_g,
               w_skip, b_skip, w_out, b_out, dilation):
    """Pure-JAX (f32) reference of the PyTorch forward pass."""
    N, C_in, T = x_ncw.shape
    R = w_in.shape[0]
    K = w_f.shape[2]
    D = int(dilation)
    PAD = (K - 1) * D

    x = jnp.transpose(x_ncw, (0, 2, 1))                           # (N, T, C_in)
    residual = jnp.einsum("ntc,rc->ntr", x, w_in[:, :, 0]) + b_in
    padded = jnp.pad(residual, ((0, 0), (PAD, 0), (0, 0)))
    filt = jnp.zeros((N, T, R)) + b_f
    gate = jnp.zeros((N, T, R)) + b_g
    for j in range(K):
        win = padded[:, j * D: j * D + T, :]
        filt = filt + jnp.einsum("ntr,or->nto", win, w_f[:, :, j])
        gate = gate + jnp.einsum("ntr,or->nto", win, w_g[:, :, j])
    gated = jnp.tanh(filt) * jax.nn.sigmoid(gate)
    skip = jnp.einsum("ntr,sr->nts", gated, w_skip[:, :, 0]) + b_skip
    out = jnp.einsum("ntr,cr->ntc", gated, w_out[:, :, 0]) + b_out + x
    return jnp.transpose(out, (0, 2, 1)), jnp.transpose(skip, (0, 2, 1))


if __name__ == "__main__":
    # Small shapes consistent with the module's forward pass.
    N, C_in, R, S, K = 2, 4, 8, 8, 3

    key = jax.random.PRNGKey(0)
    ks = jax.random.split(key, 12)

    # Deterministic synthetic parameters (PyTorch Conv1d weight shapes).
    w_in = 0.3 * jax.random.normal(ks[1], (R, C_in, 1), jnp.float32)
    b_in = 0.1 * jax.random.normal(ks[2], (R,), jnp.float32)
    w_f = 0.3 * jax.random.normal(ks[3], (R, R, K), jnp.float32)
    b_f = 0.1 * jax.random.normal(ks[4], (R,), jnp.float32)
    w_g = 0.3 * jax.random.normal(ks[5], (R, R, K), jnp.float32)
    b_g = 0.1 * jax.random.normal(ks[6], (R,), jnp.float32)
    w_skip = 0.3 * jax.random.normal(ks[7], (S, R, 1), jnp.float32)
    b_skip = 0.1 * jax.random.normal(ks[8], (S,), jnp.float32)
    w_out = 0.3 * jax.random.normal(ks[9], (C_in, R, 1), jnp.float32)
    b_out = 0.1 * jax.random.normal(ks[10], (C_in,), jnp.float32)

    fn = jax.jit(gated_residual_block,
                 static_argnames=("dilation", "t_tile", "out_dtype"))

    q = lambda a: a.astype(jnp.bfloat16).astype(jnp.float32)

    # Config 1: single time tile (T < 128).
    # Config 2: several 128-wide tiles + carried causal halo + partial last tile.
    for (T, D, tt) in ((16, 2, None), (400, 4, 128)):
        x = jax.random.normal(ks[0], (N, C_in, T), jnp.float32)

        ref_out, ref_skip = _reference(x, w_in, b_in, w_f, b_f, w_g, b_g,
                                       w_skip, b_skip, w_out, b_out, D)
        qref_out, qref_skip = _reference(q(x), q(w_in), b_in, q(w_f), b_f,
                                         q(w_g), b_g, q(w_skip), b_skip,
                                         q(w_out), b_out, D)

        out, skip = fn(x, w_in, b_in, w_f, b_f, w_g, b_g,
                       w_skip, b_skip, w_out, b_out, dilation=D, t_tile=tt)
        jax.block_until_ready((out, skip))

        assert out.shape == (N, C_in, T) and skip.shape == (N, S, T)
        out32 = out.astype(jnp.float32)
        skip32 = skip.astype(jnp.float32)
        # vs. bf16-quantized reference (matches the kernel's bf16 weights/IO)
        assert jnp.allclose(out32, qref_out, rtol=3e-2, atol=3e-2)
        assert jnp.allclose(skip32, qref_skip, rtol=3e-2, atol=3e-2)
        # loose sanity bound vs. pure-f32 reference
        assert jnp.allclose(out32, ref_out, rtol=1e-1, atol=1e-1)
        assert jnp.allclose(skip32, ref_skip, rtol=1e-1, atol=1e-1)

    print("KERNEL_OK")
</pallas_src>

<mosaic_0001>
module attributes {stable_mosaic.version = 11 : i64} {
  func.func @_grb_kernel(%arg0: i32, %arg1: i32, %arg2: memref<1x4x16xf32, #tpu.memory_space<vmem>>, %arg3: memref<8x4xbf16, #tpu.memory_space<vmem>>, %arg4: memref<8x1xf32, #tpu.memory_space<vmem>>, %arg5: memref<3x16x8xbf16, #tpu.memory_space<vmem>>, %arg6: memref<16x1xf32, #tpu.memory_space<vmem>>, %arg7: memref<8x8xbf16, #tpu.memory_space<vmem>>, %arg8: memref<8x1xf32, #tpu.memory_space<vmem>>, %arg9: memref<4x8xbf16, #tpu.memory_space<vmem>>, %arg10: memref<4x1xf32, #tpu.memory_space<vmem>>, %arg11: memref<1x4x16xbf16, #tpu.memory_space<vmem>>, %arg12: memref<1x8x16xbf16, #tpu.memory_space<vmem>>, %arg13: memref<8x144xbf16, #tpu.memory_space<vmem>>) attributes {dimension_semantics = [#tpu.dimension_semantics<parallel>, #tpu.dimension_semantics<arbitrary>], iteration_bounds = array<i64: 2, 1>, scalar_prefetch = 0 : i64, scratch_operands = 1 : i64, tpu.core_type = #tpu.core_type<tc>, window_params = [{transform_indices = @transform_0, window_bounds = array<i64: 1, 4, 16>}, {pipeline_mode = #tpu.pipeline_mode<synchronous>, transform_indices = @transform_1, window_bounds = array<i64: 8, 4>}, {pipeline_mode = #tpu.pipeline_mode<synchronous>, transform_indices = @transform_2, window_bounds = array<i64: 8, 1>}, {pipeline_mode = #tpu.pipeline_mode<synchronous>, transform_indices = @transform_3, window_bounds = array<i64: 3, 16, 8>}, {pipeline_mode = #tpu.pipeline_mode<synchronous>, transform_indices = @transform_4, window_bounds = array<i64: 16, 1>}, {pipeline_mode = #tpu.pipeline_mode<synchronous>, transform_indices = @transform_5, window_bounds = array<i64: 8, 8>}, {pipeline_mode = #tpu.pipeline_mode<synchronous>, transform_indices = @transform_6, window_bounds = array<i64: 8, 1>}, {pipeline_mode = #tpu.pipeline_mode<synchronous>, transform_indices = @transform_7, window_bounds = array<i64: 4, 8>}, {pipeline_mode = #tpu.pipeline_mode<synchronous>, transform_indices = @transform_8, window_bounds = array<i64: 4, 1>}, {transform_indices = @transform_9, window_bounds = array<i64: 1, 4, 16>}, {transform_indices = @transform_10, window_bounds = array<i64: 1, 8, 16>}]} {
    %c0_i32 = arith.constant 0 : i32
    %0 = arith.cmpi eq, %arg1, %c0_i32 : i32
    %1 = arith.extui %0 : i1 to i32
    %c0_i32_0 = arith.constant 0 : i32
    %2 = arith.cmpi ne, %1, %c0_i32_0 : i32
    scf.if %2 {
      %cst_45 = arith.constant 0.000000e+00 : bf16
      %64 = vector.broadcast %cst_45 : bf16 to vector<8x4xbf16>
      %c0_46 = arith.constant 0 : index
      %c124_47 = arith.constant 124 : index
      %65 = vector.load %arg13[%c0_46, %c124_47] : memref<8x144xbf16, #tpu.memory_space<vmem>>, vector<8x4xbf16>
      tpu.vector_store %arg13[%c0_46, %c124_47], %64 {strides = array<i32>} : memref<8x144xbf16, #tpu.memory_space<vmem>>, vector<8x4xbf16>,
    } else {
    }
    %c0_i32_1 = arith.constant 0 : i32
    %3 = arith.cmpi sgt, %arg1, %c0_i32_1 : i32
    %4 = arith.extui %3 : i1 to i32
    %c0_i32_2 = arith.constant 0 : i32
    %5 = arith.cmpi ne, %4, %c0_i32_2 : i32
    scf.if %5 {
      %c0_45 = arith.constant 0 : index
      %c140 = arith.constant 140 : index
      %64 = vector.load %arg13[%c0_45, %c140] : memref<8x144xbf16, #tpu.memory_space<vmem>>, vector<8x4xbf16>
      %c0_46 = arith.constant 0 : index
      %c124_47 = arith.constant 124 : index
      %65 = vector.load %arg13[%c0_46, %c124_47] : memref<8x144xbf16, #tpu.memory_space<vmem>>, vector<8x4xbf16>
      tpu.vector_store %arg13[%c0_46, %c124_47], %64 {strides = array<i32>} : memref<8x144xbf16, #tpu.memory_space<vmem>>, vector<8x4xbf16>,
    } else {
    }
    %c0 = arith.constant 0 : index
    %c0_3 = arith.constant 0 : index
    %c0_4 = arith.constant 0 : index
    %6 = vector.load %arg2[%c0, %c0_3, %c0_4] : memref<1x4x16xf32, #tpu.memory_space<vmem>>, vector<1x4x16xf32>
    %7 = vector.shape_cast %6 : vector<1x4x16xf32> to vector<4x16xf32>
    %8 = arith.truncf %7 : vector<4x16xf32> to vector<4x16xbf16>
    %c0_5 = arith.constant 0 : index
    %c0_6 = arith.constant 0 : index
    %9 = vector.load %arg3[%c0_5, %c0_6] : memref<8x4xbf16, #tpu.memory_space<vmem>>, vector<8x4xbf16>
    %cst = arith.constant dense<0.000000e+00> : vector<8x16xf32>
    %10 = tpu.matmul %9, %8, %cst {dimension_numbers = #tpu.dot_dimension_numbers<[1], [0], [0], [1], [0, 0, 1, 1], [], []>} : vector<8x4xbf16>, vector<4x16xbf16>, vector<8x16xf32> -> vector<8x16xf32>
    %c0_7 = arith.constant 0 : index
    %c0_8 = arith.constant 0 : index
    %11 = vector.load %arg4[%c0_7, %c0_8] : memref<8x1xf32, #tpu.memory_space<vmem>>, vector<8x1xf32>
    %12 = vector.broadcast %11 : vector<8x1xf32> to vector<8x16xf32>
    %13 = arith.addf %10, %12 : vector<8x16xf32>
    %14 = arith.truncf %13 : vector<8x16xf32> to vector<8x16xbf16>
    %c0_9 = arith.constant 0 : index
    %c128 = arith.constant 128 : index
    %15 = vector.load %arg13[%c0_9, %c128] : memref<8x144xbf16, #tpu.memory_space<vmem>>, vector<8x16xbf16>
    tpu.vector_store %arg13[%c0_9, %c128], %14 {strides = array<i32>} : memref<8x144xbf16, #tpu.memory_space<vmem>>, vector<8x16xbf16>,
    %c0_10 = arith.constant 0 : index
    %c0_11 = arith.constant 0 : index
    %c0_12 = arith.constant 0 : index
    %16 = vector.load %arg5[%c0_10, %c0_11, %c0_12] : memref<3x16x8xbf16, #tpu.memory_space<vmem>>, vector<1x16x8xbf16>
    %17 = vector.shape_cast %16 : vector<1x16x8xbf16> to vector<16x8xbf16>
    %c0_13 = arith.constant 0 : index
    %c124 = arith.constant 124 : index
    %18 = vector.load %arg13[%c0_13, %c124] : memref<8x144xbf16, #tpu.memory_space<vmem>>, vector<8x16xbf16>
    %cst_14 = arith.constant dense<0.000000e+00> : vector<16x16xf32>
    %19 = tpu.matmul %17, %18, %cst_14 {dimension_numbers = #tpu.dot_dimension_numbers<[1], [0], [0], [1], [0, 0, 1, 1], [], []>} : vector<16x8xbf16>, vector<8x16xbf16>, vector<16x16xf32> -> vector<16x16xf32>
    %c1 = arith.constant 1 : index
    %c0_15 = arith.constant 0 : index
    %c0_16 = arith.constant 0 : index
    %20 = vector.load %arg5[%c1, %c0_15, %c0_16] : memref<3x16x8xbf16, #tpu.memory_space<vmem>>, vector<1x16x8xbf16>
    %21 = vector.shape_cast %20 : vector<1x16x8xbf16> to vector<16x8xbf16>
    %c0_17 = arith.constant 0 : index
    %c126 = arith.constant 126 : index
    %22 = vector.load %arg13[%c0_17, %c126] : memref<8x144xbf16, #tpu.memory_space<vmem>>, vector<8x16xbf16>
    %cst_18 = arith.constant dense<0.000000e+00> : vector<16x16xf32>
    %23 = tpu.matmul %21, %22, %cst_18 {dimension_numbers = #tpu.dot_dimension_numbers<[1], [0], [0], [1], [0, 0, 1, 1], [], []>} : vector<16x8xbf16>, vector<8x16xbf16>, vector<16x16xf32> -> vector<16x16xf32>
    %24 = arith.addf %19, %23 : vector<16x16xf32>
    %c2 = arith.constant 2 : index
    %c0_19 = arith.constant 0 : index
    %c0_20 = arith.constant 0 : index
    %25 = vector.load %arg5[%c2, %c0_19, %c0_20] : memref<3x16x8xbf16, #tpu.memory_space<vmem>>, vector<1x16x8xbf16>
    %26 = vector.shape_cast %25 : vector<1x16x8xbf16> to vector<16x8xbf16>
    %c0_21 = arith.constant 0 : index
    %c128_22 = arith.constant 128 : index
    %27 = vector.load %arg13[%c0_21, %c128_22] : memref<8x144xbf16, #tpu.memory_space<vmem>>, vector<8x16xbf16>
    %cst_23 = arith.constant dense<0.000000e+00> : vector<16x16xf32>
    %28 = tpu.matmul %26, %27, %cst_23 {dimension_numbers = #tpu.dot_dimension_numbers<[1], [0], [0], [1], [0, 0, 1, 1], [], []>} : vector<16x8xbf16>, vector<8x16xbf16>, vector<16x16xf32> -> vector<16x16xf32>
    %29 = arith.addf %24, %28 : vector<16x16xf32>
    %c0_24 = arith.constant 0 : index
    %c0_25 = arith.constant 0 : index
    %30 = vector.load %arg6[%c0_24, %c0_25] : memref<16x1xf32, #tpu.memory_space<vmem>>, vector<16x1xf32>
    %31 = vector.broadcast %30 : vector<16x1xf32> to vector<16x16xf32>
    %32 = arith.addf %29, %31 : vector<16x16xf32>
    %33 = vector.extract_strided_slice %32 {offsets = [0, 0], sizes = [8, 16], strides = [1, 1]} : vector<16x16xf32> to vector<8x16xf32>
    %34 = math.tanh %33 : vector<8x16xf32>
    %35 = vector.extract_strided_slice %32 {offsets = [8, 0], sizes = [8, 16], strides = [1, 1]} : vector<16x16xf32> to vector<8x16xf32>
    %cst_26 = arith.constant 5.000000e-01 : f32
    %36 = vector.broadcast %cst_26 : f32 to vector<8x16xf32>
    %37 = arith.mulf %36, %35 : vector<8x16xf32>
    %38 = math.tanh %37 : vector<8x16xf32>
    %cst_27 = arith.constant 1.000000e+00 : f32
    %39 = vector.broadcast %cst_27 : f32 to vector<8x16xf32>
    %40 = arith.addf %38, %39 : vector<8x16xf32>
    %cst_28 = arith.constant 5.000000e-01 : f32
    %41 = vector.broadcast %cst_28 : f32 to vector<8x16xf32>
    %42 = arith.mulf %41, %40 : vector<8x16xf32>
    %43 = arith.mulf %34, %42 : vector<8x16xf32>
    %44 = arith.truncf %43 : vector<8x16xf32> to vector<8x16xbf16>
    %c0_29 = arith.constant 0 : index
    %c0_30 = arith.constant 0 : index
    %45 = vector.load %arg7[%c0_29, %c0_30] : memref<8x8xbf16, #tpu.memory_space<vmem>>, vector<8x8xbf16>
    %cst_31 = arith.constant dense<0.000000e+00> : vector<8x16xf32>
    %46 = tpu.matmul %45, %44, %cst_31 {dimension_numbers = #tpu.dot_dimension_numbers<[1], [0], [0], [1], [0, 0, 1, 1], [], []>} : vector<8x8xbf16>, vector<8x16xbf16>, vector<8x16xf32> -> vector<8x16xf32>
    %c0_32 = arith.constant 0 : index
    %c0_33 = arith.constant 0 : index
    %47 = vector.load %arg8[%c0_32, %c0_33] : memref<8x1xf32, #tpu.memory_space<vmem>>, vector<8x1xf32>
    %48 = vector.broadcast %47 : vector<8x1xf32> to vector<8x16xf32>
    %49 = arith.addf %46, %48 : vector<8x16xf32>
    %50 = arith.truncf %49 : vector<8x16xf32> to vector<8x16xbf16>
    %c0_34 = arith.constant 0 : index
    %c0_35 = arith.constant 0 : index
    %c0_36 = arith.constant 0 : index
    %51 = vector.load %arg12[%c0_34, %c0_35, %c0_36] : memref<1x8x16xbf16, #tpu.memory_space<vmem>>, vector<1x8x16xbf16>
    %52 = vector.shape_cast %51 : vector<1x8x16xbf16> to vector<8x16xbf16>
    %53 = vector.shape_cast %50 : vector<8x16xbf16> to vector<1x8x16xbf16>
    tpu.vector_store %arg12[%c0_34, %c0_35, %c0_36], %53 {strides = array<i32>} : memref<1x8x16xbf16, #tpu.memory_space<vmem>>, vector<1x8x16xbf16>,
    %c0_37 = arith.constant 0 : index
    %c0_38 = arith.constant 0 : index
    %54 = vector.load %arg9[%c0_37, %c0_38] : memref<4x8xbf16, #tpu.memory_space<vmem>>, vector<4x8xbf16>
    %cst_39 = arith.constant dense<0.000000e+00> : vector<4x16xf32>
    %55 = tpu.matmul %54, %44, %cst_39 {dimension_numbers = #tpu.dot_dimension_numbers<[1], [0], [0], [1], [0, 0, 1, 1], [], []>} : vector<4x8xbf16>, vector<8x16xbf16>, vector<4x16xf32> -> vector<4x16xf32>
    %c0_40 = arith.constant 0 : index
    %c0_41 = arith.constant 0 : index
    %56 = vector.load %arg10[%c0_40, %c0_41] : memref<4x1xf32, #tpu.memory_space<vmem>>, vector<4x1xf32>
    %57 = vector.broadcast %56 : vector<4x1xf32> to vector<4x16xf32>
    %58 = arith.addf %55, %57 : vector<4x16xf32>
    %59 = arith.addf %58, %7 : vector<4x16xf32>
    %60 = arith.truncf %59 : vector<4x16xf32> to vector<4x16xbf16>
    %c0_42 = arith.constant 0 : index
    %c0_43 = arith.constant 0 : index
    %c0_44 = arith.constant 0 : index
    %61 = vector.load %arg11[%c0_42, %c0_43, %c0_44] : memref<1x4x16xbf16, #tpu.memory_space<vmem>>, vector<1x4x16xbf16>
    %62 = vector.shape_cast %61 : vector<1x4x16xbf16> to vector<4x16xbf16>
    %63 = vector.shape_cast %60 : vector<4x16xbf16> to vector<1x4x16xbf16>
    tpu.vector_store %arg11[%c0_42, %c0_43, %c0_44], %63 {strides = array<i32>} : memref<1x4x16xbf16, #tpu.memory_space<vmem>>, vector<1x4x16xbf16>,
    return
  }
  func.func @transform_0(%arg0: i32, %arg1: i32) -> (i32, i32, i32) {
    %c0_i32 = arith.constant 0 : i32
    %c0_i32_0 = arith.constant 0 : i32
    return %arg0, %c0_i32, %arg1 : i32, i32, i32
  }
  func.func @transform_1(%arg0: i32, %arg1: i32) -> (i32, i32) {
    %c0_i32 = arith.constant 0 : i32
    %c0_i32_0 = arith.constant 0 : i32
    %c0_i32_1 = arith.constant 0 : i32
    return %c0_i32, %c0_i32_0 : i32, i32
  }
  func.func @transform_2(%arg0: i32, %arg1: i32) -> (i32, i32) {
    %c0_i32 = arith.constant 0 : i32
    %c0_i32_0 = arith.constant 0 : i32
    %c0_i32_1 = arith.constant 0 : i32
    return %c0_i32, %c0_i32_0 : i32, i32
  }
  func.func @transform_3(%arg0: i32, %arg1: i32) -> (i32, i32, i32) {
    %c0_i32 = arith.constant 0 : i32
    %c0_i32_0 = arith.constant 0 : i32
    %c0_i32_1 = arith.constant 0 : i32
    %c0_i32_2 = arith.constant 0 : i32
    return %c0_i32, %c0_i32_0, %c0_i32_1 : i32, i32, i32
  }
  func.func @transform_4(%arg0: i32, %arg1: i32) -> (i32, i32) {
    %c0_i32 = arith.constant 0 : i32
    %c0_i32_0 = arith.constant 0 : i32
    %c0_i32_1 = arith.constant 0 : i32
    return %c0_i32, %c0_i32_0 : i32, i32
  }
  func.func @transform_5(%arg0: i32, %arg1: i32) -> (i32, i32) {
    %c0_i32 = arith.constant 0 : i32
    %c0_i32_0 = arith.constant 0 : i32
    %c0_i32_1 = arith.constant 0 : i32
    return %c0_i32, %c0_i32_0 : i32, i32
  }
  func.func @transform_6(%arg0: i32, %arg1: i32) -> (i32, i32) {
    %c0_i32 = arith.constant 0 : i32
    %c0_i32_0 = arith.constant 0 : i32
    %c0_i32_1 = arith.constant 0 : i32
    return %c0_i32, %c0_i32_0 : i32, i32
  }
  func.func @transform_7(%arg0: i32, %arg1: i32) -> (i32, i32) {
    %c0_i32 = arith.constant 0 : i32
    %c0_i32_0 = arith.constant 0 : i32
    %c0_i32_1 = arith.constant 0 : i32
    return %c0_i32, %c0_i32_0 : i32, i32
  }
  func.func @transform_8(%arg0: i32, %arg1: i32) -> (i32, i32) {
    %c0_i32 = arith.constant 0 : i32
    %c0_i32_0 = arith.constant 0 : i32
    %c0_i32_1 = arith.constant 0 : i32
    return %c0_i32, %c0_i32_0 : i32, i32
  }
  func.func @transform_9(%arg0: i32, %arg1: i32) -> (i32, i32, i32) {
    %c0_i32 = arith.constant 0 : i32
    %c0_i32_0 = arith.constant 0 : i32
    return %arg0, %c0_i32, %arg1 : i32, i32, i32
  }
  func.func @transform_10(%arg0: i32, %arg1: i32) -> (i32, i32, i32) {
    %c0_i32 = arith.constant 0 : i32
    %c0_i32_0 = arith.constant 0 : i32
    return %arg0, %c0_i32, %arg1 : i32, i32, i32
  }
}

</mosaic_0001>

<llo_original>
// kernel: gated_residual_block.1
$region0: #{gated_residual_block.1}
  #allocation0 [shape = 'u32[]', space=smem, size = 0x4, offset = 0x4, fixed_abs, tag = 'smem constant byte address 0x4 - core index']
  #allocation1 [shape = 'u32[144,128]{1,0:T(1,128)}', space=vmem, size = 0x12000, scoped, tag = 'internal scratch']
  #allocation2 [shape = 'bf16[8,144]{1,0:T(8,128)(2,1)}', space=vmem, size = 0x1000, scoped, tag = 'scratch operand']
  %s0 = inlined_call_operand.vmem [shape: f32[2,4,16], index: 0, kind: input, shape index: {}]
  %s1 = inlined_call_operand.vmem [shape: bf16[8,4], index: 1, kind: input, shape index: {}]
  %s2 = inlined_call_operand.vmem [shape: f32[8,1], index: 2, kind: input, shape index: {}]
  %s3 = inlined_call_operand.vmem [shape: bf16[3,16,8], index: 3, kind: input, shape index: {}]
  %s4 = inlined_call_operand.vmem [shape: f32[16,1], index: 4, kind: input, shape index: {}]
  %s5 = inlined_call_operand.vmem [shape: bf16[8,8], index: 5, kind: input, shape index: {}]
  %s6 = inlined_call_operand.vmem [shape: f32[8,1], index: 6, kind: input, shape index: {}]
  %s7 = inlined_call_operand.vmem [shape: bf16[4,8], index: 7, kind: input, shape index: {}]
  %s8 = inlined_call_operand.vmem [shape: f32[4,1], index: 8, kind: input, shape index: {}]
  %s9 = inlined_call_operand.hbm [shape: bf16[2,4,16], index: 9, kind: output, shape index: {0}]
  %s10 = inlined_call_operand.hbm [shape: bf16[2,8,16], index: 10, kind: output, shape index: {1}]
  %11 = xla_tuple %s9, %s10
  %s12 = sld [smem:[#allocation0]]
  $region85: #{gated_residual_block.1} parent=0
    _
  %s14 = ssub.s32 1, %s12
  %s15 = scalar_select 0, %s14, %s12
  $region1: #{gated_residual_block.1} parent=0
    #allocation3 [shape = 'u8[2048]{0}', space=vmem, size = 0x800, scoped, tag = 'output window, operand 0']
    #allocation4 [shape = 's32[2]{0}', space=sflag, size = 0x8, scoped, tag = 'scoped memory for gated_residual_block.1']
    #allocation5 [shape = 'u8[4096]{0}', space=vmem, size = 0x1000, scoped, tag = 'output window, operand 1']
    #allocation6 [shape = 's32[2]{0}', space=sflag, size = 0x8, scoped, tag = 'scoped memory for gated_residual_block.1']
    %16 = vsyncpa [#allocation4], 0
    %s17 = scalar_lea.sflag [#allocation4], 1
    %18 = vsyncpa %s17, 0
    %19 = vsyncpa [#allocation6], 0
    %s20 = scalar_lea.sflag [#allocation6], 1
    %21 = vsyncpa %s20, 0
    loop: start=0, step=1, limit=4
    $region2: #{gated_residual_block.1} parent=1 // loop_pre_header
      _
    $region3: #{gated_residual_block.1} parent=1 // loop_header
      %s23 = sphi 0, %s27
      %p24 = scmp.ge.s32.totalorder %s23, 4
      %s30 = sphi 0, %s42
      %s31 = sphi 0, %s38
      %s32 = sphi 0, %s30
      %s33 = sphi 0, %s31
      %s34 = sphi 0, %s32
      %s35 = sphi 0, %s33
      %s47 = sphi 0, %s49
      %s50 = sphi 0, %s47
      %s51 = sphi 0, %s50
      %s67 = sphi 0, %s51
      %s71 = sphi 0, %s71
      %s73 = sphi 0, %s71
      %s74 = sphi 0, %s73
      %s88 = sphi 0, %s74
      %s92 = sphi 0, %s92
      %s94 = sphi 0, %s92
      %s95 = sphi 0, %s94
      %s109 = sphi 0, %s95
      %s113 = sphi 0, %s113
      %s115 = sphi 0, %s113
      %s116 = sphi 0, %s115
      %s130 = sphi 0, %s116
      %s134 = sphi 0, %s134
      %s136 = sphi 0, %s134
      %s137 = sphi 0, %s136
      %s151 = sphi 0, %s137
      %s155 = sphi 0, %s155
      %s157 = sphi 0, %s155
      %s158 = sphi 0, %s157
      %s172 = sphi 0, %s158
      %s176 = sphi 0, %s176
      %s178 = sphi 0, %s176
      %s179 = sphi 0, %s178
      %s193 = sphi 0, %s179
      %s197 = sphi 0, %s197
      %s199 = sphi 0, %s197
      %s200 = sphi 0, %s199
      %s214 = sphi 0, %s200
      %s218 = sphi 0, %s218
      %s220 = sphi 0, %s218
      %s221 = sphi 0, %s220
      %s235 = sphi 0, %s221
      %s243 = sphi 0, %s245
      %s246 = sphi 0, %s243
      %s247 = sphi 0, %s246
      %s263 = sphi 0, %s247
      %s271 = sphi 0, %s273
      %s274 = sphi 0, %s271
      %s275 = sphi 0, %s274
      %s291 = sphi 0, %s275
    $region4: #{gated_residual_block.1} parent=1 // loop_header_branch
      %26 = sbr.rel (%p24) target = $region8
    $region5: #{gated_residual_block.1} parent=1 // loop_body
      %s28 = ssub.s32 %s23, 1
      %s29 = ssub.s32 %s23, 2
      %s36 = sadd.s32 1, %s31
      %p37 = scmp.ge.s32.totalorder %s36, 1
      %s38 = scalar_select %p37, 0, %s36
      %s39 = sadd.s32 1, %s30
      %s40 = scalar_select %p37, %s39, %s30
      %p41 = scmp.ge.s32.totalorder %s40, 2
      %s42 = scalar_select %p41, 0, %s40
      %s43 = ssub.s32 %s30, %s42
      %s44 = ssub.s32 %s31, %s38
      %s45 = sor.u32 %s43, %s44
      %p46 = scmp.eq.s32.totalorder %s45, 0
      %s48 = sadd.s32 %s47, 1
      %s49 = scalar_select %p46, %s47, %s48
      %p52 = pneg %p46
      %p53 = scmp.eq.s32.totalorder %s23, 1
      %p54 = por %p52, %p53
      %p55 = scmp.ne.s32.totalorder %s47, %s50
      %p56 = scmp.eq.s32.totalorder %s23, 0
      %p57 = por %p55, %p56
      %p58 = scmp.ne.s32.totalorder %s47, %s50
      %p59 = scmp.eq.s32.totalorder %s28, 1
      %p60 = por %p58, %p59
      %p61 = scmp.ne.s32.totalorder %s50, %s51
      %p62 = scmp.eq.s32.totalorder %s28, 0
      %p63 = por %p61, %p62
      %p64 = scmp.ne.s32.totalorder %s50, %s51
      %p65 = scmp.eq.s32.totalorder %s29, 1
      %p66 = por %p64, %p65
      %p68 = scmp.ne.s32.totalorder %s51, %s67
      %p69 = scmp.eq.s32.totalorder %s29, 0
      %p70 = por %p68, %p69
      %s72 = sadd.s32 %s71, 1
      %p75 = scmp.eq.s32.totalorder %s23, 1
      %p76 = scmp.ne.s32.totalorder %s71, %s73
      %p77 = scmp.eq.s32.totalorder %s23, 0
      %p78 = por %p76, %p77
      %p79 = scmp.ne.s32.totalorder %s71, %s73
      %p80 = scmp.eq.s32.totalorder %s28, 1
      %p81 = por %p79, %p80
      %p82 = scmp.ne.s32.totalorder %s73, %s74
      %p83 = scmp.eq.s32.totalorder %s28, 0
      %p84 = por %p82, %p83
      %p85 = scmp.ne.s32.totalorder %s73, %s74
      %p86 = scmp.eq.s32.totalorder %s29, 1
      %p87 = por %p85, %p86
      %p89 = scmp.ne.s32.totalorder %s74, %s88
      %p90 = scmp.eq.s32.totalorder %s29, 0
      %p91 = por %p89, %p90
      %s93 = sadd.s32 %s92, 1
      %p96 = scmp.eq.s32.totalorder %s23, 1
      %p97 = scmp.ne.s32.totalorder %s92, %s94
      %p98 = scmp.eq.s32.totalorder %s23, 0
      %p99 = por %p97, %p98
      %p100 = scmp.ne.s32.totalorder %s92, %s94
      %p101 = scmp.eq.s32.totalorder %s28, 1
      %p102 = por %p100, %p101
      %p103 = scmp.ne.s32.totalorder %s94, %s95
      %p104 = scmp.eq.s32.totalorder %s28, 0
      %p105 = por %p103, %p104
      %p106 = scmp.ne.s32.totalorder %s94, %s95
      %p107 = scmp.eq.s32.totalorder %s29, 1
      %p108 = por %p106, %p107
      %p110 = scmp.ne.s32.totalorder %s95, %s109
      %p111 = scmp.eq.s32.totalorder %s29, 0
      %p112 = por %p110, %p111
      %s114 = sadd.s32 %s113, 1
      %p117 = scmp.eq.s32.totalorder %s23, 1
      %p118 = scmp.ne.s32.totalorder %s113, %s115
      %p119 = scmp.eq.s32.totalorder %s23, 0
      %p120 = por %p118, %p119
      %p121 = scmp.ne.s32.totalorder %s113, %s115
      %p122 = scmp.eq.s32.totalorder %s28, 1
      %p123 = por %p121, %p122
      %p124 = scmp.ne.s32.totalorder %s115, %s116
      %p125 = scmp.eq.s32.totalorder %s28, 0
      %p126 = por %p124, %p125
      %p127 = scmp.ne.s32.totalorder %s115, %s116
      %p128 = scmp.eq.s32.totalorder %s29, 1
      %p129 = por %p127, %p128
      %p131 = scmp.ne.s32.totalorder %s116, %s130
      %p132 = scmp.eq.s32.totalorder %s29, 0
      %p133 = por %p131, %p132
      %s135 = sadd.s32 %s134, 1
      %p138 = scmp.eq.s32.totalorder %s23, 1
      %p139 = scmp.ne.s32.totalorder %s134, %s136
      %p140 = scmp.eq.s32.totalorder %s23, 0
      %p141 = por %p139, %p140
      %p142 = scmp.ne.s32.totalorder %s134, %s136
      %p143 = scmp.eq.s32.totalorder %s28, 1
      %p144 = por %p142, %p143
      %p145 = scmp.ne.s32.totalorder %s136, %s137
      %p146 = scmp.eq.s32.totalorder %s28, 0
      %p147 = por %p145, %p146
      %p148 = scmp.ne.s32.totalorder %s136, %s137
      %p149 = scmp.eq.s32.totalorder %s29, 1
      %p150 = por %p148, %p149
      %p152 = scmp.ne.s32.totalorder %s137, %s151
      %p153 = scmp.eq.s32.totalorder %s29, 0
      %p154 = por %p152, %p153
      %s156 = sadd.s32 %s155, 1
      %p159 = scmp.eq.s32.totalorder %s23, 1
      %p160 = scmp.ne.s32.totalorder %s155, %s157
      %p161 = scmp.eq.s32.totalorder %s23, 0
      %p162 = por %p160, %p161
      %p163 = scmp.ne.s32.totalorder %s155, %s157
      %p164 = scmp.eq.s32.totalorder %s28, 1
      %p165 = por %p163, %p164
      %p166 = scmp.ne.s32.totalorder %s157, %s158
      %p167 = scmp.eq.s32.totalorder %s28, 0
      %p168 = por %p166, %p167
      %p169 = scmp.ne.s32.totalorder %s157, %s158
      %p170 = scmp.eq.s32.totalorder %s29, 1
      %p171 = por %p169, %p170
      %p173 = scmp.ne.s32.totalorder %s158, %s172
      %p174 = scmp.eq.s32.totalorder %s29, 0
      %p175 = por %p173, %p174
      %s177 = sadd.s32 %s176, 1
      %p180 = scmp.eq.s32.totalorder %s23, 1
      %p181 = scmp.ne.s32.totalorder %s176, %s178
      %p182 = scmp.eq.s32.totalorder %s23, 0
      %p183 = por %p181, %p182
      %p184 = scmp.ne.s32.totalorder %s176, %s178
      %p185 = scmp.eq.s32.totalorder %s28, 1
      %p186 = por %p184, %p185
      %p187 = scmp.ne.s32.totalorder %s178, %s179
      %p188 = scmp.eq.s32.totalorder %s28, 0
      %p189 = por %p187, %p188
      %p190 = scmp.ne.s32.totalorder %s178, %s179
      %p191 = scmp.eq.s32.totalorder %s29, 1
      %p192 = por %p190, %p191
      %p194 = scmp.ne.s32.totalorder %s179, %s193
      %p195 = scmp.eq.s32.totalorder %s29, 0
      %p196 = por %p194, %p195
      %s198 = sadd.s32 %s197, 1
      %p201 = scmp.eq.s32.totalorder %s23, 1
      %p202 = scmp.ne.s32.totalorder %s197, %s199
      %p203 = scmp.eq.s32.totalorder %s23, 0
      %p204 = por %p202, %p203
      %p205 = scmp.ne.s32.totalorder %s197, %s199
      %p206 = scmp.eq.s32.totalorder %s28, 1
      %p207 = por %p205, %p206
      %p208 = scmp.ne.s32.totalorder %s199, %s200
      %p209 = scmp.eq.s32.totalorder %s28, 0
      %p210 = por %p208, %p209
      %p211 = scmp.ne.s32.totalorder %s199, %s200
      %p212 = scmp.eq.s32.totalorder %s29, 1
      %p213 = por %p211, %p212
      %p215 = scmp.ne.s32.totalorder %s200, %s214
      %p216 = scmp.eq.s32.totalorder %s29, 0
      %p217 = por %p215, %p216
      %s219 = sadd.s32 %s218, 1
      %p222 = scmp.eq.s32.totalorder %s23, 1
      %p223 = scmp.ne.s32.totalorder %s218, %s220
      %p224 = scmp.eq.s32.totalorder %s23, 0
      %p225 = por %p223, %p224
      %p226 = scmp.ne.s32.totalorder %s218, %s220
      %p227 = scmp.eq.s32.totalorder %s28, 1
      %p228 = por %p226, %p227
      %p229 = scmp.ne.s32.totalorder %s220, %s221
      %p230 = scmp.eq.s32.totalorder %s28, 0
      %p231 = por %p229, %p230
      %p232 = scmp.ne.s32.totalorder %s220, %s221
      %p233 = scmp.eq.s32.totalorder %s29, 1
      %p234 = por %p232, %p233
      %p236 = scmp.ne.s32.totalorder %s221, %s235
      %p237 = scmp.eq.s32.totalorder %s29, 0
      %p238 = por %p236, %p237
      %s239 = ssub.s32 %s30, %s42
      %s240 = ssub.s32 %s31, %s38
      %s241 = sor.u32 %s239, %s240
      %p242 = scmp.eq.s32.totalorder %s241, 0
      %s244 = sadd.s32 %s243, 1
      %s245 = scalar_select %p242, %s243, %s244
      %p248 = pneg %p242
      %p249 = scmp.eq.s32.totalorder %s23, 1
      %p250 = por %p248, %p249
      %p251 = scmp.ne.s32.totalorder %s243, %s246
      %p252 = scmp.eq.s32.totalorder %s23, 0
      %p253 = por %p251, %p252
      %p254 = scmp.ne.s32.totalorder %s243, %s246
      %p255 = scmp.eq.s32.totalorder %s28, 1
      %p256 = por %p254, %p255
      %p257 = scmp.ne.s32.totalorder %s246, %s247
      %p258 = scmp.eq.s32.totalorder %s28, 0
      %p259 = por %p257, %p258
      %p260 = scmp.ne.s32.totalorder %s246, %s247
      %p261 = scmp.eq.s32.totalorder %s29, 1
      %p262 = por %p260, %p261
      %p264 = scmp.ne.s32.totalorder %s247, %s263
      %p265 = scmp.eq.s32.totalorder %s29, 0
      %p266 = por %p264, %p265
      %s267 = ssub.s32 %s30, %s42
      %s268 = ssub.s32 %s31, %s38
      %s269 = sor.u32 %s267, %s268
      %p270 = scmp.eq.s32.totalorder %s269, 0
      %s272 = sadd.s32 %s271, 1
      %s273 = scalar_select %p270, %s271, %s272
      %p276 = pneg %p270
      %p277 = scmp.eq.s32.totalorder %s23, 1
      %p278 = por %p276, %p277
      %p279 = scmp.ne.s32.totalorder %s271, %s274
      %p280 = scmp.eq.s32.totalorder %s23, 0
      %p281 = por %p279, %p280
      %p282 = scmp.ne.s32.totalorder %s271, %s274
      %p283 = scmp.eq.s32.totalorder %s28, 1
      %p284 = por %p282, %p283
      %p285 = scmp.ne.s32.totalorder %s274, %s275
      %p286 = scmp.eq.s32.totalorder %s28, 0
      %p287 = por %p285, %p286
      %p288 = scmp.ne.s32.totalorder %s274, %s275
      %p289 = scmp.eq.s32.totalorder %s29, 1
      %p290 = por %p288, %p289
      %p292 = scmp.ne.s32.totalorder %s275, %s291
      %p293 = scmp.eq.s32.totalorder %s29, 0
      %p294 = por %p292, %p293
      %p295 = scmp.le.s32.totalorder 1, %s23
      %p296 = scmp.lt.s32.totalorder %s23, 3
      %p297 = pnand %p295, %p296
      %p298 = pneg %p297
      // Predicated region
      $region9: #{gated_residual_block.1} parent=5 // pred_check
        _
      $region10: #{gated_residual_block.1} parent=5 // pred_check_branch
        %300 = sbr.rel (%p297) target = $region12
      $region11: #{gated_residual_block.1} parent=5 // pred_region
        %s301 = ssub.s32 %s23, 1
        // Predicated region
        $region13: #{gated_residual_block.1} parent=11 // pred_check
          %p302 = pneg %p84
        $region14: #{gated_residual_block.1} parent=11 // pred_check_branch
          %304 = sbr.rel (%p302) target = $region16
        $region15: #{gated_residual_block.1} parent=11 // pred_region
          _
        $region16: #{gated_residual_block.1} parent=11 // pred_fallthru
          _
        // Predicated region
        $region17: #{gated_residual_block.1} parent=11 // pred_check
          %p305 = pneg %p105
        $region18: #{gated_residual_block.1} parent=11 // pred_check_branch
          %307 = sbr.rel (%p305) target = $region20
        $region19: #{gated_residual_block.1} parent=11 // pred_region
          _
        $region20: #{gated_residual_block.1} parent=11 // pred_fallthru
          _
        // Predicated region
        $region21: #{gated_residual_block.1} parent=11 // pred_check
          %p308 = pneg %p126
        $region22: #{gated_residual_block.1} parent=11 // pred_check_branch
          %310 = sbr.rel (%p308) target = $region24
        $region23: #{gated_residual_block.1} parent=11 // pred_region
          _
        $region24: #{gated_residual_block.1} parent=11 // pred_fallthru
          _
        // Predicated region
        $region25: #{gated_residual_block.1} parent=11 // pred_check
          %p311 = pneg %p147
        $region26: #{gated_residual_block.1} parent=11 // pred_check_branch
          %313 = sbr.rel (%p311) target = $region28
        $region27: #{gated_residual_block.1} parent=11 // pred_region
          _
        $region28: #{gated_residual_block.1} parent=11 // pred_fallthru
          _
        // Predicated region
        $region29: #{gated_residual_block.1} parent=11 // pred_check
          %p314 = pneg %p168
        $region30: #{gated_residual_block.1} parent=11 // pred_check_branch
          %316 = sbr.rel (%p314) target = $region32
        $region31: #{gated_residual_block.1} parent=11 // pred_region
          _
        $region32: #{gated_residual_block.1} parent=11 // pred_fallthru
          _
        // Predicated region
        $region33: #{gated_residual_block.1} parent=11 // pred_check
          %p317 = pneg %p189
        $region34: #{gated_residual_block.1} parent=11 // pred_check_branch
          %319 = sbr.rel (%p317) target = $region36
        $region35: #{gated_residual_block.1} parent=11 // pred_region
          _
        $region36: #{gated_residual_block.1} parent=11 // pred_fallthru
          _
        // Predicated region
        $region37: #{gated_residual_block.1} parent=11 // pred_check
          %p320 = pneg %p210
        $region38: #{gated_residual_block.1} parent=11 // pred_check_branch
          %322 = sbr.rel (%p320) target = $region40
        $region39: #{gated_residual_block.1} parent=11 // pred_region
          _
        $region40: #{gated_residual_block.1} parent=11 // pred_fallthru
          _
        // Predicated region
        $region41: #{gated_residual_block.1} parent=11 // pred_check
          %p323 = pneg %p231
        $region42: #{gated_residual_block.1} parent=11 // pred_check_branch
          %325 = sbr.rel (%p323) target = $region44
        $region43: #{gated_residual_block.1} parent=11 // pred_region
          _
        $region44: #{gated_residual_block.1} parent=11 // pred_fallthru
          _
      $region12: #{gated_residual_block.1} parent=5 // pred_fallthru
        _
      %p326 = scmp.lt.s32.totalorder %s23, 2
      // Predicated region
      $region45: #{gated_residual_block.1} parent=5 // pred_check
        %p327 = pneg %p326
      $region46: #{gated_residual_block.1} parent=5 // pred_check_branch
        %329 = sbr.rel (%p327) target = $region48
      $region47: #{gated_residual_block.1} parent=5 // pred_region
        // Predicated region
        $region49: #{gated_residual_block.1} parent=47 // pred_check
          %p330 = pneg %p57
        $region50: #{gated_residual_block.1} parent=47 // pred_check_branch
          %332 = sbr.rel (%p330) target = $region52
        $region51: #{gated_residual_block.1} parent=47 // pred_region
          %p333 = scmp.lt.s32.totalorder %s30, 1
          %s334 = scalar_select %p333, %s30, 1
          %p335 = scmp.lt.s32.totalorder %s31, 0
          %s336 = scalar_select %p335, %s31, 0
          %s337 = sadd.s32 %s336, %s334
          %s338 = smul.addr %s337, 4
          %s339 = scalar_lea.vmem %s0, %s338
        $region52: #{gated_residual_block.1} parent=47 // pred_fallthru
          _
      $region48: #{gated_residual_block.1} parent=5 // pred_fallthru
        _
      %p340 = scmp.le.s32.totalorder 1, %s23
      %p341 = scmp.lt.s32.totalorder %s23, 3
      %p342 = pnand %p340, %p341
      %p343 = pneg %p342
      // Predicated region
      $region53: #{gated_residual_block.1} parent=5 // pred_check
        _
      $region54: #{gated_residual_block.1} parent=5 // pred_check_branch
        %345 = sbr.rel (%p342) target = $region56
      $region55: #{gated_residual_block.1} parent=5 // pred_region
        %s346 = ssub.s32 %s23, 1
        %p347 = scmp.lt.s32.totalorder %s32, 1
        %s348 = scalar_select %p347, %s32, 1
        %p349 = scmp.lt.s32.totalorder %s33, 0
        %s350 = scalar_select %p349, %s33, 0
        %s351 = sadd.s32 %s350, %s348
        %s352 = smul.addr %s351, 4
        %s353 = scalar_lea.vmem %s0, %s352
        %p354 = pneg %p63
        %p355 = pneg %p60
        %p356 = pneg %p84
        %p357 = pneg %p81
        %p358 = pneg %p105
        %p359 = pneg %p102
        %p360 = pneg %p126
        %p361 = pneg %p123
        %p362 = pneg %p147
        %p363 = pneg %p144
        %p364 = pneg %p168
        %p365 = pneg %p165
        %p366 = pneg %p189
        %p367 = pneg %p186
        %p368 = pneg %p210
        %p369 = pneg %p207
        %p370 = pneg %p231
        %p371 = pneg %p228
        %p372 = pneg %p259
        %p373 = pneg %p256
        %s374 = sand.u32 %s246, 1
        %s375 = scalar_lea.sflag [#allocation4], %s374
        %s376 = sand.u32 %s246, 1
        %s377 = smul.addr %s376, 2
        %s378 = scalar_lea.vmem [#allocation3], %s377
        %p379 = pneg %p287
        %p380 = pneg %p284
        %s381 = sand.u32 %s274, 1
        %s382 = scalar_lea.sflag [#allocation6], %s381
        %s383 = sand.u32 %s274, 1
        %s384 = smul.addr %s383, 4
        %s385 = scalar_lea.vmem [#allocation5], %s384
        %p386 = scmp.lt.s32.totalorder %s32, 1
        %s387 = scalar_select %p386, %s32, 1
        %p388 = scmp.lt.s32.totalorder %s33, 0
        %s389 = scalar_select %p388, %s33, 0
        %s390 = sadd.s32 %s389, %s387
        %s391 = smul.addr %s390, 4
        %s392 = scalar_lea.vmem %s0, %s391
        %p394 = scmp.eq.s32.totalorder %s33, 0
        // Predicated region
        $region57: #{gated_residual_block.1} parent=55 // pred_check
          %p395 = pneg %p394
        $region58: #{gated_residual_block.1} parent=55 // pred_check_branch
          %397 = sbr.rel (%p395) target = $region60
        $region59: #{gated_residual_block.1} parent=55 // pred_region
          %vm398 = vcmask 1044448
          %399 = vst.msk [vmem:[#allocation2] sm:$0xf] %vm398, 0
        $region60: #{gated_residual_block.1} parent=55 // pred_fallthru
          _
        %p400 = scmp.gt.s32.totalorder %s33, 0
        // Predicated region
        $region61: #{gated_residual_block.1} parent=55 // pred_check
          %p401 = pneg %p400
        $region62: #{gated_residual_block.1} parent=55 // pred_check_branch
          %403 = sbr.rel (%p401) target = $region64
        $region63: #{gated_residual_block.1} parent=55 // pred_region
          %v404 = vld [vmem:[#allocation2 + $0x4] sm:$0xf]
          %406 = vrot.lane.b32.xlu0 %v404, 112
          %v407 = vpop.permute.xlu0 %406
          %vm409 = vcmask 1044448
          %410 = vst.msk [vmem:[#allocation2] sm:$0xf] %vm409, %v407
        $region64: #{gated_residual_block.1} parent=55 // pred_fallthru
          _
        %v411 = vld [vmem:[%s392] sm:$0xf]
        %v412 = vpack.c.bf16 %v411, %v411
        %v413 = vld [vmem:[%s1] sm:$0xf]
        %v414 = vld [vmem:[%s2] sm:$0xff]
        %416 = vset.pattern.permute.xlu0 0
        %417 = vperm.xlu0 %416, %v414
        %v418 = vpop.permute.xlu0 %417
        %vm420 = vcmask 31744
        %v422 = vsel %vm420, %v413, 0
        %vm424 = vcmask 1041408
        %v426 = vsel %vm424, %v412, 0
        %428 = vmatprep.subr.bf16.mxu0 0
        %429 = vmatpush1.bf16.msra.mxu0 %v426
        %430 = vmatprep.subr.bf16.mxu0 0
        %431 = vmatpush1.bf16.msra.mxu0 0
        %432 = vmatprep.subr.bf16.mxu0 0
        %433 = vmatpush1.bf16.msra.mxu0 0
        %434 = vmatprep.subr.bf16.mxu0 0
        %435 = vmatpush1.bf16.msra.mxu0 0
        %436 = vmatprep.subr.bf16.mxu0 0
        %437 = vmatpush1.bf16.msra.mxu0 0
        %438 = vmatprep.subr.bf16.mxu0 0
        %439 = vmatpush1.bf16.msra.mxu0 0
        %440 = vmatprep.subr.bf16.mxu0 0
        %441 = vmatpush1.bf16.msra.mxu0 0
        %442 = vmatprep.subr.bf16.mxu0 0
        %443 = vmatpush1.bf16.msra.mxu0 0
        %444 = vmatprep.subr.bf16.mxu0 0
        %445 = vmatpush1.bf16.msra.mxu0 0
        %446 = vmatprep.subr.bf16.mxu0 0
        %447 = vmatpush1.bf16.msra.mxu0 0
        %448 = vmatprep.subr.bf16.mxu0 0
        %449 = vmatpush1.bf16.msra.mxu0 0
        %450 = vmatprep.subr.bf16.mxu0 0
        %451 = vmatpush1.bf16.msra.mxu0 0
        %452 = vmatprep.subr.bf16.mxu0 0
        %453 = vmatpush1.bf16.msra.mxu0 0
        %454 = vmatprep.subr.bf16.mxu0 0
        %455 = vmatpush1.bf16.msra.mxu0 0
        %456 = vmatprep.subr.bf16.mxu0 0
        %457 = vmatpush1.bf16.msra.mxu0 0
        %458 = vmatprep.subr.bf16.mxu0 0
        %459 = vmatpush1.bf16.msra.mxu0 0
        %460 = vmatprep.mubr.bf16.mxu0 0
        %461 = vmatmul.mubr.bf16.gmra.mrb[0].mxu0 %v422
        %v462 = vpop.f32.mrb[0].mxu0
        %v463 = vadd.f32 %v418, %v462
        %v464 = vpop.f32.mrb[0].mxu0
        %v465 = vpop.f32.mrb[0].mxu0
        %v466 = vpop.f32.mrb[0].mxu0
        %467 = vdwg.mxu0
        %v468 = vpack.c.bf16 %v463, %v463
        %vm469 = vcmask 125952
        %470 = vst.msk [vmem:[#allocation2 + $0x4] sm:$0xf] %vm469, %v468
        %v471 = vld [vmem:[%s3] sm:$0xf]
        %v472 = vld [vmem:[%s3 + $0x4] sm:$0xf]
        %v473 = vld [vmem:[#allocation2] sm:$0xff]
        %s474 = scalar_lea.vmem %s3, 8
        %v475 = vld [vmem:[%s474] sm:$0xf]
        %v476 = vld [vmem:[%s474 + $0x4] sm:$0xf]
        %v479 = vunpack.c.l.b16 %v475
        %v480 = vunpack.c.l.b16 %v476
        %v481 = vpack.c.b16 %v480, %v479
        %v483 = vunpack.c.l.b16 %v473
        %v484 = vunpack.c.h.b16 %v473
        %v485 = vpack.c.b16 %v483, %v483
        %v486 = vpack.c.b16 %v484, %v484
        %487 = vrot.lane.b32.xlu0 %v485, 2
        %v488 = vpop.permute.xlu0 %487
        %489 = vrot.lane.b32.xlu0 %v486, 2
        %v490 = vpop.permute.xlu0 %489
        %vm491 = vcmask 15360
        %v492 = vsel %vm491, %v488, %v490
        %vm493 = vcmask 64512
        %v495 = vsel %vm493, %v481, 0
        %vm497 = vcmask 1043456
        %v499 = vsel %vm497, %v492, 0
        %501 = vmatprep.subr.bf16.mxu0 0
        %502 = vmatpush1.bf16.msra.mxu0 %v499
        %503 = vmatprep.subr.bf16.mxu0 0
        %504 = vmatpush1.bf16.msra.mxu0 0
        %505 = vmatprep.subr.bf16.mxu0 0
        %506 = vmatpush1.bf16.msra.mxu0 0
        %507 = vmatprep.subr.bf16.mxu0 0
        %508 = vmatpush1.bf16.msra.mxu0 0
        %509 = vmatprep.subr.bf16.mxu0 0
        %510 = vmatpush1.bf16.msra.mxu0 0
        %511 = vmatprep.subr.bf16.mxu0 0
        %512 = vmatpush1.bf16.msra.mxu0 0
        %513 = vmatprep.subr.bf16.mxu0 0
        %514 = vmatpush1.bf16.msra.mxu0 0
        %515 = vmatprep.subr.bf16.mxu0 0
        %516 = vmatpush1.bf16.msra.mxu0 0
        %517 = vmatprep.subr.bf16.mxu0 0
        %518 = vmatpush1.bf16.msra.mxu0 0
        %519 = vmatprep.subr.bf16.mxu0 0
        %520 = vmatpush1.bf16.msra.mxu0 0
        %521 = vmatprep.subr.bf16.mxu0 0
        %522 = vmatpush1.bf16.msra.mxu0 0
        %523 = vmatprep.subr.bf16.mxu0 0
        %524 = vmatpush1.bf16.msra.mxu0 0
        %525 = vmatprep.subr.bf16.mxu0 0
        %526 = vmatpush1.bf16.msra.mxu0 0
        %527 = vmatprep.subr.bf16.mxu0 0
        %528 = vmatpush1.bf16.msra.mxu0 0
        %529 = vmatprep.subr.bf16.mxu0 0
        %530 = vmatpush1.bf16.msra.mxu0 0
        %531 = vmatprep.subr.bf16.mxu0 0
        %532 = vmatpush1.bf16.msra.mxu0 0
        %533 = vmatprep.mubr.bf16.mxu0 0
        %534 = vmatmul.mubr.bf16.gmra.mrb[0].mxu0 %v495
        %v535 = vpop.f32.mrb[0].mxu0
        %v536 = vadd.f32 0.0, %v535
        %v537 = vpop.f32.mrb[0].mxu0
        %v538 = vpop.f32.mrb[0].mxu0
        %v539 = vadd.f32 0.0, %v538
        %v540 = vpop.f32.mrb[0].mxu0
        %541 = vdwg.mxu0
        %v544 = vunpack.c.l.b16 %v471
        %v545 = vunpack.c.l.b16 %v472
        %v546 = vpack.c.b16 %v545, %v544
        %547 = vrot.lane.b32.xlu0 %v485, 4
        %v548 = vpop.permute.xlu0 %547
        %549 = vrot.lane.b32.xlu0 %v486, 4
        %v550 = vpop.permute.xlu0 %549
        %vm551 = vcmask 31744
        %v552 = vsel %vm551, %v548, %v550
        %v554 = vsel %vm493, %v546, 0
        %v557 = vsel %vm497, %v552, 0
        %559 = vmatprep.subr.bf16.mxu0 0
        %560 = vmatpush1.bf16.msra.mxu0 %v557
        %561 = vmatprep.subr.bf16.mxu0 0
        %562 = vmatpush1.bf16.msra.mxu0 0
        %563 = vmatprep.subr.bf16.mxu0 0
        %564 = vmatpush1.bf16.msra.mxu0 0
        %565 = vmatprep.subr.bf16.mxu0 0
        %566 = vmatpush1.bf16.msra.mxu0 0
        %567 = vmatprep.subr.bf16.mxu0 0
        %568 = vmatpush1.bf16.msra.mxu0 0
        %569 = vmatprep.subr.bf16.mxu0 0
        %570 = vmatpush1.bf16.msra.mxu0 0
        %571 = vmatprep.subr.bf16.mxu0 0
        %572 = vmatpush1.bf16.msra.mxu0 0
        %573 = vmatprep.subr.bf16.mxu0 0
        %574 = vmatpush1.bf16.msra.mxu0 0
        %575 = vmatprep.subr.bf16.mxu0 0
        %576 = vmatpush1.bf16.msra.mxu0 0
        %577 = vmatprep.subr.bf16.mxu0 0
        %578 = vmatpush1.bf16.msra.mxu0 0
        %579 = vmatprep.subr.bf16.mxu0 0
        %580 = vmatpush1.bf16.msra.mxu0 0
        %581 = vmatprep.subr.bf16.mxu0 0
        %582 = vmatpush1.bf16.msra.mxu0 0
        %583 = vmatprep.subr.bf16.mxu0 0
        %584 = vmatpush1.bf16.msra.mxu0 0
        %585 = vmatprep.subr.bf16.mxu0 0
        %586 = vmatpush1.bf16.msra.mxu0 0
        %587 = vmatprep.subr.bf16.mxu0 0
        %588 = vmatpush1.bf16.msra.mxu0 0
        %589 = vmatprep.subr.bf16.mxu0 0
        %590 = vmatpush1.bf16.msra.mxu0 0
        %591 = vmatprep.mubr.bf16.mxu0 0
        %592 = vmatmul.mubr.bf16.gmra.mrb[0].mxu0 %v554
        %v593 = vpop.f32.mrb[0].mxu0
        %v594 = vadd.f32 %v536, %v593
        %v595 = vpop.f32.mrb[0].mxu0
        %v596 = vpop.f32.mrb[0].mxu0
        %v597 = vadd.f32 %v539, %v596
        %v598 = vpop.f32.mrb[0].mxu0
        %599 = vdwg.mxu0
        %s600 = scalar_lea.vmem %s3, 16
        %v601 = vld [vmem:[%s600] sm:$0xf]
        %v602 = vld [vmem:[%s600 + $0x4] sm:$0xf]
        %v603 = vld [vmem:[#allocation2 + $0x4] sm:$0xf]
        %v606 = vunpack.c.l.b16 %v601
        %v607 = vunpack.c.l.b16 %v602
        %v608 = vpack.c.b16 %v607, %v606
        %v610 = vsel %vm493, %v608, 0
        %v613 = vsel %vm497, %v603, 0
        %615 = vmatprep.subr.bf16.mxu0 0
        %616 = vmatpush1.bf16.msra.mxu0 %v613
        %617 = vmatprep.subr.bf16.mxu0 0
        %618 = vmatpush1.bf16.msra.mxu0 0
        %619 = vmatprep.subr.bf16.mxu0 0
        %620 = vmatpush1.bf16.msra.mxu0 0
        %621 = vmatprep.subr.bf16.mxu0 0
        %622 = vmatpush1.bf16.msra.mxu0 0
        %623 = vmatprep.subr.bf16.mxu0 0
        %624 = vmatpush1.bf16.msra.mxu0 0
        %625 = vmatprep.subr.bf16.mxu0 0
        %626 = vmatpush1.bf16.msra.mxu0 0
        %627 = vmatprep.subr.bf16.mxu0 0
        %628 = vmatpush1.bf16.msra.mxu0 0
        %629 = vmatprep.subr.bf16.mxu0 0
        %630 = vmatpush1.bf16.msra.mxu0 0
        %631 = vmatprep.subr.bf16.mxu0 0
        %632 = vmatpush1.bf16.msra.mxu0 0
        %633 = vmatprep.subr.bf16.mxu0 0
        %634 = vmatpush1.bf16.msra.mxu0 0
        %635 = vmatprep.subr.bf16.mxu0 0
        %636 = vmatpush1.bf16.msra.mxu0 0
        %637 = vmatprep.subr.bf16.mxu0 0
        %638 = vmatpush1.bf16.msra.mxu0 0
        %639 = vmatprep.subr.bf16.mxu0 0
        %640 = vmatpush1.bf16.msra.mxu0 0
        %641 = vmatprep.subr.bf16.mxu0 0
        %642 = vmatpush1.bf16.msra.mxu0 0
        %643 = vmatprep.subr.bf16.mxu0 0
        %644 = vmatpush1.bf16.msra.mxu0 0
        %645 = vmatprep.subr.bf16.mxu0 0
        %646 = vmatpush1.bf16.msra.mxu0 0
        %647 = vmatprep.mubr.bf16.mxu0 0
        %648 = vmatmul.mubr.bf16.gmra.mrb[0].mxu0 %v610
        %v649 = vpop.f32.mrb[0].mxu0
        %v650 = vadd.f32 0.0, %v649
        %v651 = vpop.f32.mrb[0].mxu0
        %v652 = vpop.f32.mrb[0].mxu0
        %v653 = vadd.f32 0.0, %v652
        %v654 = vpop.f32.mrb[0].mxu0
        %655 = vdwg.mxu0
        %v656 = vadd.f32 %v594, %v650
        %v657 = vadd.f32 %v597, %v653
        %v658 = vld [vmem:[%s4] sm:$0xff]
        %v659 = vld [vmem:[%s4 + $0x8] sm:$0xff]
        %661 = vset.pattern.permute.xlu0 0
        %662 = vperm.xlu0 %661, %v658
        %v663 = vpop.permute.xlu0 %662
        %666 = vset.pattern.permute.xlu0 0
        %667 = vperm.xlu0 %666, %v659
        %v668 = vpop.permute.xlu0 %667
        %v670 = vadd.f32 %v656, %v663
        %v671 = vadd.f32 %v657, %v668
        %v672 = vtanh.pop %v670
        %v673 = vmul.f32 %v671, 0.5
        %v674 = vtanh.pop %v673
        %v675 = vadd.f32 %v674, 1.0
        %v676 = vmul.f32 %v675, 0.5
        %v677 = vmul.f32 %v672, %v676
        %v678 = vpack.c.bf16 %v677, %v677
        %v679 = vld [vmem:[%s5] sm:$0xf]
        %v680 = vld [vmem:[%s6] sm:$0xff]
        %682 = vset.pattern.permute.xlu0 0
        %683 = vperm.xlu0 %682, %v680
        %v684 = vpop.permute.xlu0 %683
        %v687 = vsel %vm493, %v679, 0
        %v690 = vsel %vm497, %v678, 0
        %692 = vmatprep.subr.bf16.mxu0 0
        %693 = vmatpush1.bf16.msra.mxu0 %v690
        %694 = vmatprep.subr.bf16.mxu0 0
        %695 = vmatpush1.bf16.msra.mxu0 0
        %696 = vmatprep.subr.bf16.mxu0 0
        %697 = vmatpush1.bf16.msra.mxu0 0
        %698 = vmatprep.subr.bf16.mxu0 0
        %699 = vmatpush1.bf16.msra.mxu0 0
        %700 = vmatprep.subr.bf16.mxu0 0
        %701 = vmatpush1.bf16.msra.mxu0 0
        %702 = vmatprep.subr.bf16.mxu0 0
        %703 = vmatpush1.bf16.msra.mxu0 0
        %704 = vmatprep.subr.bf16.mxu0 0
        %705 = vmatpush1.bf16.msra.mxu0 0
        %706 = vmatprep.subr.bf16.mxu0 0
        %707 = vmatpush1.bf16.msra.mxu0 0
        %708 = vmatprep.subr.bf16.mxu0 0
        %709 = vmatpush1.bf16.msra.mxu0 0
        %710 = vmatprep.subr.bf16.mxu0 0
        %711 = vmatpush1.bf16.msra.mxu0 0
        %712 = vmatprep.subr.bf16.mxu0 0
        %713 = vmatpush1.bf16.msra.mxu0 0
        %714 = vmatprep.subr.bf16.mxu0 0
        %715 = vmatpush1.bf16.msra.mxu0 0
        %716 = vmatprep.subr.bf16.mxu0 0
        %717 = vmatpush1.bf16.msra.mxu0 0
        %718 = vmatprep.subr.bf16.mxu0 0
        %719 = vmatpush1.bf16.msra.mxu0 0
        %720 = vmatprep.subr.bf16.mxu0 0
        %721 = vmatpush1.bf16.msra.mxu0 0
        %722 = vmatprep.subr.bf16.mxu0 0
        %723 = vmatpush1.bf16.msra.mxu0 0
        %724 = vmatprep.mubr.bf16.mxu0 0
        %725 = vmatmul.mubr.bf16.gmra.mrb[0].mxu0 %v687
        %v726 = vpop.f32.mrb[0].mxu0
        %v727 = vadd.f32 %v684, %v726
        %v728 = vpop.f32.mrb[0].mxu0
        %v729 = vpop.f32.mrb[0].mxu0
        %v730 = vpop.f32.mrb[0].mxu0
        %731 = vdwg.mxu0
        %v732 = vpack.c.bf16 %v727, %v727
        %733 = vst.msk [vmem:[%s385] sm:$0xf] %vm469, %v732
        %v734 = vld [vmem:[%s7] sm:$0x3]
        %v735 = vld [vmem:[%s8] sm:$0xf]
        %737 = vset.pattern.permute.xlu0 0
        %738 = vperm.xlu0 %737, %v735
        %v739 = vpop.permute.xlu0 %738
        %v742 = vsel %vm493, %v734, 0
        %744 = vmatprep.subr.bf16.mxu0 0
        %745 = vmatpush1.bf16.msra.mxu0 %v690
        %746 = vmatprep.subr.bf16.mxu0 0
        %747 = vmatpush1.bf16.msra.mxu0 0
        %748 = vmatprep.subr.bf16.mxu0 0
        %749 = vmatpush1.bf16.msra.mxu0 0
        %750 = vmatprep.subr.bf16.mxu0 0
        %751 = vmatpush1.bf16.msra.mxu0 0
        %752 = vmatprep.subr.bf16.mxu0 0
        %753 = vmatpush1.bf16.msra.mxu0 0
        %754 = vmatprep.subr.bf16.mxu0 0
        %755 = vmatpush1.bf16.msra.mxu0 0
        %756 = vmatprep.subr.bf16.mxu0 0
        %757 = vmatpush1.bf16.msra.mxu0 0
        %758 = vmatprep.subr.bf16.mxu0 0
        %759 = vmatpush1.bf16.msra.mxu0 0
        %760 = vmatprep.subr.bf16.mxu0 0
        %761 = vmatpush1.bf16.msra.mxu0 0
        %762 = vmatprep.subr.bf16.mxu0 0
        %763 = vmatpush1.bf16.msra.mxu0 0
        %764 = vmatprep.subr.bf16.mxu0 0
        %765 = vmatpush1.bf16.msra.mxu0 0
        %766 = vmatprep.subr.bf16.mxu0 0
        %767 = vmatpush1.bf16.msra.mxu0 0
        %768 = vmatprep.subr.bf16.mxu0 0
        %769 = vmatpush1.bf16.msra.mxu0 0
        %770 = vmatprep.subr.bf16.mxu0 0
        %771 = vmatpush1.bf16.msra.mxu0 0
        %772 = vmatprep.subr.bf16.mxu0 0
        %773 = vmatpush1.bf16.msra.mxu0 0
        %774 = vmatprep.subr.bf16.mxu0 0
        %775 = vmatpush1.bf16.msra.mxu0 0
        %776 = vmatprep.mubr.bf16.mxu0 0
        %777 = vmatmul.mubr.bf16.gmra.mrb[0].mxu0 %v742
        %v778 = vpop.f32.mrb[0].mxu0
        %v779 = vadd.f32 %v739, %v778
        %v780 = vpop.f32.mrb[0].mxu0
        %v781 = vpop.f32.mrb[0].mxu0
        %v782 = vpop.f32.mrb[0].mxu0
        %783 = vdwg.mxu0
        %v784 = vadd.f32 %v779, %v411
        %v785 = vpack.c.bf16 %v784, %v784
        %vm786 = vcmask 123904
        %787 = vst.msk [vmem:[%s378] sm:$0x3] %vm786, %v785
        %s788 = sand.u32 %s246, 1
        %s789 = scalar_lea.sflag [#allocation4], %s788
        %s790 = sand.u32 %s246, 1
        %s791 = smul.addr %s790, 2
        %s792 = scalar_lea.vmem [#allocation3], %s791
        %s793 = sand.u32 %s274, 1
        %s794 = scalar_lea.sflag [#allocation6], %s793
        %s795 = sand.u32 %s274, 1
        %s796 = smul.addr %s795, 4
        %s797 = scalar_lea.vmem [#allocation5], %s796
        // Predicated region
        $region65: #{gated_residual_block.1} parent=55 // pred_check
          %p798 = pneg %p256
        $region66: #{gated_residual_block.1} parent=55 // pred_check_branch
          %800 = sbr.rel (%p798) target = $region68
        $region67: #{gated_residual_block.1} parent=55 // pred_region
          %s802 = ssub.s32 32, 32
          %803 = vsyncadd %s789, %s802
          %s804 = sadd.s32 %s33, %s32
          %s805 = smul.addr %s804, 32
          %s806 = scalar_lea.hbm %s9, %s805
          %s808 = sshll.u32 %s792, 4
          %s809 = int_to_ptr.vmem [resolvable:$true] %s808
          %811 = dma.vmem_to_hbm [thread:$0]  %s809, 32, %s806, %s789
        $region68: #{gated_residual_block.1} parent=55 // pred_fallthru
          _
        // Predicated region
        $region69: #{gated_residual_block.1} parent=55 // pred_check
          %p812 = pneg %p284
        $region70: #{gated_residual_block.1} parent=55 // pred_check_branch
          %814 = sbr.rel (%p812) target = $region72
        $region71: #{gated_residual_block.1} parent=55 // pred_region
          %s816 = ssub.s32 64, 64
          %817 = vsyncadd %s794, %s816
          %s818 = sadd.s32 %s33, %s32
          %s819 = smul.addr %s818, 64
          %s820 = scalar_lea.hbm %s10, %s819
          %s822 = sshll.u32 %s797, 4
          %s823 = int_to_ptr.vmem [resolvable:$true] %s822
          %825 = dma.vmem_to_hbm [thread:$0]  %s823, 64, %s820, %s794
        $region72: #{gated_residual_block.1} parent=55 // pred_fallthru
          _
      $region56: #{gated_residual_block.1} parent=5 // pred_fallthru
        _
      %p826 = scmp.le.s32.totalorder 2, %s23
      // Predicated region
      $region73: #{gated_residual_block.1} parent=5 // pred_check
        %p827 = pneg %p826
      $region74: #{gated_residual_block.1} parent=5 // pred_check_branch
        %829 = sbr.rel (%p827) target = $region76
      $region75: #{gated_residual_block.1} parent=5 // pred_region
        %s830 = ssub.s32 %s23, 2
        // Predicated region
        $region77: #{gated_residual_block.1} parent=75 // pred_check
          %p831 = pneg %p262
        $region78: #{gated_residual_block.1} parent=75 // pred_check_branch
          %833 = sbr.rel (%p831) target = $region80
        $region79: #{gated_residual_block.1} parent=75 // pred_region
          %s834 = sand.u32 %s247, 1
          %s835 = scalar_lea.sflag [#allocation4], %s834
          %s836 = sand.u32 %s247, 1
          %s837 = smul.addr %s836, 2
          %s838 = scalar_lea.vmem [#allocation3], %s837
          %839 = dma.done %s835, 32
        $region80: #{gated_residual_block.1} parent=75 // pred_fallthru
          _
        // Predicated region
        $region81: #{gated_residual_block.1} parent=75 // pred_check
          %p840 = pneg %p290
        $region82: #{gated_residual_block.1} parent=75 // pred_check_branch
          %842 = sbr.rel (%p840) target = $region84
        $region83: #{gated_residual_block.1} parent=75 // pred_region
          %s843 = sand.u32 %s275, 1
          %s844 = scalar_lea.sflag [#allocation6], %s843
          %s845 = sand.u32 %s275, 1
          %s846 = smul.addr %s845, 4
          %s847 = scalar_lea.vmem [#allocation5], %s846
          %848 = dma.done %s844, 64
        $region84: #{gated_residual_block.1} parent=75 // pred_fallthru
          _
      $region76: #{gated_residual_block.1} parent=5 // pred_fallthru
        _
    $region6: #{gated_residual_block.1} parent=1 // loop_footer
      %s27 = sadd.s32 1, %s23
    $region7: #{gated_residual_block.1} parent=1 // loop_footer_branch
      %22 = sbr.rel target = $region3
    $region8: #{gated_residual_block.1} parent=1 // loop_exit
      _
    %849 = vsyncpa [#allocation4], 1
    %s850 = scalar_lea.sflag [#allocation4], 1
    %851 = vsyncpa %s850, 1
    %852 = vsyncpa [#allocation6], 1
    %s853 = scalar_lea.sflag [#allocation6], 1
    %854 = vsyncpa %s853, 1

</llo_original>
